<compile_context>
chip_gen: v7x
topology: tpu7x:2x2x1
jax: 0.10.0
libtpu: 0.0.40
codegen_flags: <defaults>
</compile_context>

<pallas_src>
import jax
import jax.numpy as jnp
import numpy as np
from jax.experimental import pallas as pl
from jax.experimental.pallas import tpu as pltpu


def _round_up(x, m):
    return ((x + m - 1) // m) * m


def _num_tensorcores_per_chip():
    """2 for megacore-style chips (v7x, v4), 1 for v5e/v6e.  Perf-only heuristic."""
    try:
        kind = jax.devices()[0].device_kind.lower()
    except Exception:  # pragma: no cover - CPU / interpret fallback
        return 1
    return 2 if ("v7" in kind or "7x" in kind or "v4" in kind) else 1


def _make_kernel(n_token, pack):
    def kernel(ids_ref, iota_ref, tab_ref, out_ref):
        ids = ids_ref[...]                        # (rows, pack) int32
        iota = iota_ref[...]                      # (1, pack*n_token) int32, grid-invariant input
        # onehot[j, c*n_token + v] = (ids[j, c] == v).  Each packed column c only
        # matches inside its own [c*n_token, (c+1)*n_token) block (ids assumed
        # in-range), so pack compares + (pack-1) ors build the whole one-hot;
        # everything stays in mask domain until one final cast.
        match = iota == ids[:, 0:1]
        for c in range(1, pack):
            match = match | (iota == (ids[:, c:c + 1] + c * n_token))
        # 0/1 values are exact in any float dtype; matching the table dtype means
        # a bf16 table gets the native single-pass bf16 MXU path (half the
        # operand traffic), while an f32 table avoids a wasted promote.
        onehot = match.astype(tab_ref.dtype)
        # One MXU matmul: gathers, projects, scales and lane-packs in one shot.
        out_ref[...] = jnp.dot(onehot, tab_ref[...],
                               preferred_element_type=jnp.float32)

    return kernel


def prepare_adaptive_embedding_table(emb_weights, emb_projs, d_proj, *,
                                     table_dtype=jnp.float32):
    """Fold per-cluster tables + projections + sqrt(d_proj) into one lane-packed
    block-diagonal lookup table.  Call ONCE per weight update (not per forward);
    the forward kernel only consumes the returned table."""
    n_token = sum(int(w.shape[0]) for w in emb_weights)
    pack = 128 // d_proj if (d_proj <= 128 and 128 % d_proj == 0) else 1
    emb_scale = float(d_proj) ** 0.5
    # Clusters are contiguous in token-id space, so concatenation restores
    # global token order.
    C = jnp.concatenate(
        [w.astype(jnp.float32) @ p.astype(jnp.float32).T
         for w, p in zip(emb_weights, emb_projs)], axis=0) * emb_scale
    # Block-diagonal packed table in a single op, built directly in the target
    # dtype: the MXU then emits `pack` tokens per 128-lane output row, so stores
    # are full-width vst with no in-kernel relayout.
    table = jnp.kron(jnp.eye(pack, dtype=table_dtype), C.astype(table_dtype))
    return table, n_token, pack


def adaptive_embedding_forward(inp, table, n_token, d_proj, pack, *,
                               max_tile_rows=256):
    """inp: (seq_len, batch) int32 token ids; returns (seq_len, batch, d_proj) f32."""
    seq_len, batch = inp.shape
    T = seq_len * batch
    K = pack * n_token
    lanes = pack * d_proj

    # ---- tiling: fixed large tiles, pad rows to a multiple of the tile -------
    rows_needed = -(-T // pack)
    tile_rows = min(max_tile_rows, _round_up(rows_needed, 8))
    if _num_tensorcores_per_chip() >= 2:
        # Multi-TensorCore chips only (v7x): if the whole problem fits one tile,
        # split it so the "parallel" grid axis gives both cores a step.  On
        # v5e/v6e (single core) splitting would only add per-step overhead.
        if _round_up(rows_needed, 8) <= tile_rows and tile_rows >= 16:
            tile_rows = _round_up(tile_rows // 2, 8)
    rows_total = _round_up(_round_up(rows_needed, 8), tile_rows)
    Tpad = rows_total * pack
    grid = (rows_total // tile_rows,)

    ids_flat = inp.reshape(-1).astype(jnp.int32)
    if Tpad != T:
        ids_flat = jnp.pad(ids_flat, (0, Tpad - T))       # pad id 0; sliced off below
    ids2d = ids_flat.reshape(rows_total, pack)
    iota2d = jnp.arange(K, dtype=jnp.int32).reshape(1, K)  # hoisted, grid-invariant

    kernel = _make_kernel(n_token, pack)

    # ---- VMEM budget + cost estimate -----------------------------------------
    tbytes = jnp.dtype(table.dtype).itemsize
    est = (2 * tile_rows * pack * 4          # ids tiles (double-buffered)
           + 2 * K * 4                       # iota row
           + 2 * K * lanes * tbytes          # table (worst case: double-buffered)
           + 2 * tile_rows * lanes * 4       # out tiles
           + tile_rows * K * 4)              # one-hot vreg-spill headroom
    vmem_limit = int(min(max(2 * est, 32 << 20), 100 << 20))

    cost = pl.CostEstimate(
        flops=2 * rows_total * K * lanes,
        transcendentals=0,
        bytes_accessed=rows_total * pack * 4 + K * lanes * tbytes
        + rows_total * lanes * 4)

    def run(single_buffer_constants):
        const_kw = ({"pipeline_mode": pl.Buffered(buffer_count=1)}
                    if single_buffer_constants else {})
        return pl.pallas_call(
            kernel,
            out_shape=jax.ShapeDtypeStruct((rows_total, lanes), jnp.float32),
            grid_spec=pltpu.PrefetchScalarGridSpec(
                num_scalar_prefetch=0,
                grid=grid,
                in_specs=[
                    pl.BlockSpec((tile_rows, pack), lambda i: (i, 0)),
                    # Constant-index-map inputs: single-buffer them (nothing to
                    # pipeline), which matters once the table is large.
                    pl.BlockSpec((1, K), lambda i: (0, 0), **const_kw),
                    pl.BlockSpec((K, lanes), lambda i: (0, 0), **const_kw),
                ],
                out_specs=pl.BlockSpec((tile_rows, lanes), lambda i: (i, 0)),
            ),
            compiler_params=pltpu.CompilerParams(
                dimension_semantics=("parallel",),
                vmem_limit_bytes=vmem_limit),
            cost_estimate=cost,
        )(ids2d, iota2d, table)

    try:
        out_packed = run(True)
    except Exception:
        # Fallback for jax versions where pipeline_mode=pl.Buffered(1) is not
        # supported on the Mosaic pallas_call path; default double-buffering of
        # the two small constant inputs is functionally identical.
        out_packed = run(False)

    out = out_packed.reshape(Tpad, d_proj)[:T]
    return out.reshape(seq_len, batch, d_proj)


def adaptive_embedding(inp, emb_weights, emb_projs, cutoff_ends, d_proj, *,
                       table_dtype=jnp.float32):
    """One-shot convenience wrapper (folds the table every call).  For real use,
    call prepare_adaptive_embedding_table() once per weight update and reuse the
    table across forwards via adaptive_embedding_forward()."""
    table, n_token, pack = prepare_adaptive_embedding_table(
        emb_weights, emb_projs, d_proj, table_dtype=table_dtype)
    assert n_token == int(cutoff_ends[-1])
    return adaptive_embedding_forward(inp, table, n_token, d_proj, pack)


def adaptive_embedding_reference(inp, emb_weights, emb_projs, cutoff_ends, d_proj):
    """Pure-numpy reference mirroring the PyTorch forward (div_val > 1 branch)."""
    inp_flat = np.asarray(inp).reshape(-1)
    out = np.zeros((inp_flat.shape[0], d_proj), np.float32)
    for i in range(len(cutoff_ends) - 1):
        l_idx, r_idx = cutoff_ends[i], cutoff_ends[i + 1]
        mask = (inp_flat >= l_idx) & (inp_flat < r_idx)
        idx = np.nonzero(mask)[0]
        if idx.size == 0:
            continue
        local = inp_flat[idx] - l_idx
        emb = np.asarray(emb_weights[i])[local]                 # (k, d_emb_i)
        out[idx] = emb @ np.asarray(emb_projs[i]).T             # (k, d_proj)
    out *= float(d_proj) ** 0.5
    return out.reshape(*inp.shape, d_proj)


if __name__ == "__main__":
    # Module hyper-parameters (consistent with AdaptiveEmbedding.__init__)
    n_token = 64
    d_embed = 32
    d_proj = 32
    cutoffs = [32, 48]
    div_val = 2
    cutoff_ends = [0] + cutoffs + [n_token]

    key = jax.random.PRNGKey(0)

    # Deterministic parameter init (embedding tables ~ N(0,1), projs ~ N(0, 0.02))
    emb_weights, emb_projs = [], []
    for i in range(len(cutoff_ends) - 1):
        l_idx, r_idx = cutoff_ends[i], cutoff_ends[i + 1]
        d_emb_i = d_embed // (div_val ** i)
        key, k1, k2 = jax.random.split(key, 3)
        emb_weights.append(jax.random.normal(k1, (r_idx - l_idx, d_emb_i), jnp.float32))
        emb_projs.append(0.02 * jax.random.normal(k2, (d_proj, d_emb_i), jnp.float32))

    # Fold the table ONCE (per weight update) and reuse it across forwards.
    table_f32, n_tok, pack = prepare_adaptive_embedding_table(emb_weights, emb_projs, d_proj)
    assert n_tok == n_token

    # Primary small example: (seq_len=8, batch=2) token ids spanning all clusters.
    seq_len, batch = 8, 2
    key, kin = jax.random.split(key)
    inp = jax.random.randint(kin, (seq_len, batch), 0, n_token, dtype=jnp.int32)
    out = jax.block_until_ready(
        adaptive_embedding_forward(inp, table_f32, n_token, d_proj, pack))
    ref = adaptive_embedding_reference(inp, emb_weights, emb_projs, cutoff_ends, d_proj)
    assert out.shape == (seq_len, batch, d_proj)
    np.testing.assert_allclose(np.asarray(out), ref, rtol=1e-5, atol=1e-5)

    # Second (still small) shape: exercises the multi-tile / megacore-split grid
    # path with the SAME cached table (no per-forward folding work).
    seq_len2, batch2 = 32, 8
    key, kin2 = jax.random.split(key)
    inp2 = jax.random.randint(kin2, (seq_len2, batch2), 0, n_token, dtype=jnp.int32)
    out2 = jax.block_until_ready(
        adaptive_embedding_forward(inp2, table_f32, n_token, d_proj, pack))
    ref2 = adaptive_embedding_reference(inp2, emb_weights, emb_projs, cutoff_ends, d_proj)
    np.testing.assert_allclose(np.asarray(out2), ref2, rtol=1e-5, atol=1e-5)

    # Gated reduced-precision path: bf16 folded table -> native bf16 MXU pass.
    # One-hot selection stays exact; table values quantize to bf16, so compare
    # with a correspondingly looser tolerance.
    table_bf16, _, _ = prepare_adaptive_embedding_table(
        emb_weights, emb_projs, d_proj, table_dtype=jnp.bfloat16)
    out3 = jax.block_until_ready(
        adaptive_embedding_forward(inp2, table_bf16, n_token, d_proj, pack))
    np.testing.assert_allclose(np.asarray(out3), ref2, rtol=2e-2, atol=2e-2)

    print("KERNEL_OK")
</pallas_src>

<mosaic_0001>
module attributes {stable_mosaic.version = 11 : i64} {
  func.func @kernel(%arg0: i32, %arg1: memref<8x4xi32, #tpu.memory_space<vmem>>, %arg2: memref<1x256xi32, #tpu.memory_space<vmem>>, %arg3: memref<256x128xf32, #tpu.memory_space<vmem>>, %arg4: memref<8x128xf32, #tpu.memory_space<vmem>>) attributes {dimension_semantics = [#tpu.dimension_semantics<parallel>], iteration_bounds = array<i64: 1>, scalar_prefetch = 0 : i64, scratch_operands = 0 : i64, tpu.core_type = #tpu.core_type<tc>, window_params = [{transform_indices = @transform_0, window_bounds = array<i64: 8, 4>}, {pipeline_mode = #tpu.pipeline_mode<synchronous>, transform_indices = @transform_1, window_bounds = array<i64: 1, 256>}, {pipeline_mode = #tpu.pipeline_mode<synchronous>, transform_indices = @transform_2, window_bounds = array<i64: 256, 128>}, {transform_indices = @transform_3, window_bounds = array<i64: 8, 128>}]} {
    %c0 = arith.constant 0 : index
    %c0_0 = arith.constant 0 : index
    %0 = vector.load %arg1[%c0, %c0_0] : memref<8x4xi32, #tpu.memory_space<vmem>>, vector<8x4xi32>
    %c0_1 = arith.constant 0 : index
    %c0_2 = arith.constant 0 : index
    %1 = vector.load %arg2[%c0_1, %c0_2] : memref<1x256xi32, #tpu.memory_space<vmem>>, vector<1x256xi32>
    %2 = vector.extract_strided_slice %0 {offsets = [0, 0], sizes = [8, 1], strides = [1, 1]} : vector<8x4xi32> to vector<8x1xi32>
    %3 = vector.broadcast %1 : vector<1x256xi32> to vector<8x256xi32>
    %4 = vector.broadcast %2 : vector<8x1xi32> to vector<8x256xi32>
    %5 = arith.cmpi eq, %3, %4 : vector<8x256xi32>
    %6 = vector.extract_strided_slice %0 {offsets = [0, 1], sizes = [8, 1], strides = [1, 1]} : vector<8x4xi32> to vector<8x1xi32>
    %c64_i32 = arith.constant 64 : i32
    %7 = vector.broadcast %c64_i32 : i32 to vector<8x1xi32>
    %8 = arith.addi %6, %7 : vector<8x1xi32>
    %9 = vector.broadcast %1 : vector<1x256xi32> to vector<8x256xi32>
    %10 = vector.broadcast %8 : vector<8x1xi32> to vector<8x256xi32>
    %11 = arith.cmpi eq, %9, %10 : vector<8x256xi32>
    %12 = arith.ori %5, %11 : vector<8x256xi1>
    %13 = vector.extract_strided_slice %0 {offsets = [0, 2], sizes = [8, 1], strides = [1, 1]} : vector<8x4xi32> to vector<8x1xi32>
    %c128_i32 = arith.constant 128 : i32
    %14 = vector.broadcast %c128_i32 : i32 to vector<8x1xi32>
    %15 = arith.addi %13, %14 : vector<8x1xi32>
    %16 = vector.broadcast %1 : vector<1x256xi32> to vector<8x256xi32>
    %17 = vector.broadcast %15 : vector<8x1xi32> to vector<8x256xi32>
    %18 = arith.cmpi eq, %16, %17 : vector<8x256xi32>
    %19 = arith.ori %12, %18 : vector<8x256xi1>
    %20 = vector.extract_strided_slice %0 {offsets = [0, 3], sizes = [8, 1], strides = [1, 1]} : vector<8x4xi32> to vector<8x1xi32>
    %c192_i32 = arith.constant 192 : i32
    %21 = vector.broadcast %c192_i32 : i32 to vector<8x1xi32>
    %22 = arith.addi %20, %21 : vector<8x1xi32>
    %23 = vector.broadcast %1 : vector<1x256xi32> to vector<8x256xi32>
    %24 = vector.broadcast %22 : vector<8x1xi32> to vector<8x256xi32>
    %25 = arith.cmpi eq, %23, %24 : vector<8x256xi32>
    %26 = arith.ori %19, %25 : vector<8x256xi1>
    %27 = arith.extui %26 : vector<8x256xi1> to vector<8x256xi32>
    %28 = arith.sitofp %27 : vector<8x256xi32> to vector<8x256xf32>
    %c0_3 = arith.constant 0 : index
    %c0_4 = arith.constant 0 : index
    %29 = vector.load %arg3[%c0_3, %c0_4] : memref<256x128xf32, #tpu.memory_space<vmem>>, vector<256x128xf32>
    %cst = arith.constant dense<0.000000e+00> : vector<8x128xf32>
    %30 = tpu.matmul %28, %29, %cst {dimension_numbers = #tpu.dot_dimension_numbers<[1], [0], [0], [1], [0, 0, 1, 1], [], []>} : vector<8x256xf32>, vector<256x128xf32>, vector<8x128xf32> -> vector<8x128xf32>
    %c0_5 = arith.constant 0 : index
    %c0_6 = arith.constant 0 : index
    %31 = vector.load %arg4[%c0_5, %c0_6] : memref<8x128xf32, #tpu.memory_space<vmem>>, vector<8x128xf32>
    tpu.vector_store %arg4[%c0_5, %c0_6], %30 {strides = array<i32>} : memref<8x128xf32, #tpu.memory_space<vmem>>, vector<8x128xf32>,
    return
  }
  func.func @transform_0(%arg0: i32) -> (i32, i32) {
    %c0_i32 = arith.constant 0 : i32
    %c0_i32_0 = arith.constant 0 : i32
    return %arg0, %c0_i32 : i32, i32
  }
  func.func @transform_1(%arg0: i32) -> (i32, i32) {
    %c0_i32 = arith.constant 0 : i32
    %c0_i32_0 = arith.constant 0 : i32
    %c0_i32_1 = arith.constant 0 : i32
    return %c0_i32, %c0_i32_0 : i32, i32
  }
  func.func @transform_2(%arg0: i32) -> (i32, i32) {
    %c0_i32 = arith.constant 0 : i32
    %c0_i32_0 = arith.constant 0 : i32
    %c0_i32_1 = arith.constant 0 : i32
    return %c0_i32, %c0_i32_0 : i32, i32
  }
  func.func @transform_3(%arg0: i32) -> (i32, i32) {
    %c0_i32 = arith.constant 0 : i32
    %c0_i32_0 = arith.constant 0 : i32
    return %arg0, %c0_i32 : i32, i32
  }
}

module attributes {stable_mosaic.version = 11 : i64} {
  func.func @kernel(%arg0: i32, %arg1: memref<8x4xi32, #tpu.memory_space<vmem>>, %arg2: memref<1x256xi32, #tpu.memory_space<vmem>>, %arg3: memref<256x128xf32, #tpu.memory_space<vmem>>, %arg4: memref<8x128xf32, #tpu.memory_space<vmem>>) attributes {dimension_semantics = [#tpu.dimension_semantics<parallel>], iteration_bounds = array<i64: 1>, scalar_prefetch = 0 : i64, scratch_operands = 0 : i64, tpu.core_type = #tpu.core_type<tc>, window_params = [{transform_indices = @transform_0, window_bounds = array<i64: 8, 4>}, {pipeline_mode = #tpu.pipeline_mode<synchronous>, transform_indices = @transform_1, window_bounds = array<i64: 1, 256>}, {pipeline_mode = #tpu.pipeline_mode<synchronous>, transform_indices = @transform_2, window_bounds = array<i64: 256, 128>}, {transform_indices = @transform_3, window_bounds = array<i64: 8, 128>}]} {
    %c0 = arith.constant 0 : index
    %c0_0 = arith.constant 0 : index
    %0 = vector.load %arg1[%c0, %c0_0] : memref<8x4xi32, #tpu.memory_space<vmem>>, vector<8x4xi32>
    %c0_1 = arith.constant 0 : index
    %c0_2 = arith.constant 0 : index
    %1 = vector.load %arg2[%c0_1, %c0_2] : memref<1x256xi32, #tpu.memory_space<vmem>>, vector<1x256xi32>
    %2 = vector.extract_strided_slice %0 {offsets = [0, 0], sizes = [8, 1], strides = [1, 1]} : vector<8x4xi32> to vector<8x1xi32>
    %3 = vector.broadcast %1 : vector<1x256xi32> to vector<8x256xi32>
    %4 = vector.broadcast %2 : vector<8x1xi32> to vector<8x256xi32>
    %5 = arith.cmpi eq, %3, %4 : vector<8x256xi32>
    %6 = vector.extract_strided_slice %0 {offsets = [0, 1], sizes = [8, 1], strides = [1, 1]} : vector<8x4xi32> to vector<8x1xi32>
    %c64_i32 = arith.constant 64 : i32
    %7 = vector.broadcast %c64_i32 : i32 to vector<8x1xi32>
    %8 = arith.addi %6, %7 : vector<8x1xi32>
    %9 = vector.broadcast %1 : vector<1x256xi32> to vector<8x256xi32>
    %10 = vector.broadcast %8 : vector<8x1xi32> to vector<8x256xi32>
    %11 = arith.cmpi eq, %9, %10 : vector<8x256xi32>
    %12 = arith.ori %5, %11 : vector<8x256xi1>
    %13 = vector.extract_strided_slice %0 {offsets = [0, 2], sizes = [8, 1], strides = [1, 1]} : vector<8x4xi32> to vector<8x1xi32>
    %c128_i32 = arith.constant 128 : i32
    %14 = vector.broadcast %c128_i32 : i32 to vector<8x1xi32>
    %15 = arith.addi %13, %14 : vector<8x1xi32>
    %16 = vector.broadcast %1 : vector<1x256xi32> to vector<8x256xi32>
    %17 = vector.broadcast %15 : vector<8x1xi32> to vector<8x256xi32>
    %18 = arith.cmpi eq, %16, %17 : vector<8x256xi32>
    %19 = arith.ori %12, %18 : vector<8x256xi1>
    %20 = vector.extract_strided_slice %0 {offsets = [0, 3], sizes = [8, 1], strides = [1, 1]} : vector<8x4xi32> to vector<8x1xi32>
    %c192_i32 = arith.constant 192 : i32
    %21 = vector.broadcast %c192_i32 : i32 to vector<8x1xi32>
    %22 = arith.addi %20, %21 : vector<8x1xi32>
    %23 = vector.broadcast %1 : vector<1x256xi32> to vector<8x256xi32>
    %24 = vector.broadcast %22 : vector<8x1xi32> to vector<8x256xi32>
    %25 = arith.cmpi eq, %23, %24 : vector<8x256xi32>
    %26 = arith.ori %19, %25 : vector<8x256xi1>
    %27 = arith.extui %26 : vector<8x256xi1> to vector<8x256xi32>
    %28 = arith.sitofp %27 : vector<8x256xi32> to vector<8x256xf32>
    %c0_3 = arith.constant 0 : index
    %c0_4 = arith.constant 0 : index
    %29 = vector.load %arg3[%c0_3, %c0_4] : memref<256x128xf32, #tpu.memory_space<vmem>>, vector<256x128xf32>
    %cst = arith.constant dense<0.000000e+00> : vector<8x128xf32>
    %30 = tpu.matmul %28, %29, %cst {dimension_numbers = #tpu.dot_dimension_numbers<[1], [0], [0], [1], [0, 0, 1, 1], [], []>} : vector<8x256xf32>, vector<256x128xf32>, vector<8x128xf32> -> vector<8x128xf32>
    %c0_5 = arith.constant 0 : index
    %c0_6 = arith.constant 0 : index
    %31 = vector.load %arg4[%c0_5, %c0_6] : memref<8x128xf32, #tpu.memory_space<vmem>>, vector<8x128xf32>
    tpu.vector_store %arg4[%c0_5, %c0_6], %30 {strides = array<i32>} : memref<8x128xf32, #tpu.memory_space<vmem>>, vector<8x128xf32>,
    return
  }
  func.func @transform_0(%arg0: i32) -> (i32, i32) {
    %c0_i32 = arith.constant 0 : i32
    %c0_i32_0 = arith.constant 0 : i32
    return %arg0, %c0_i32 : i32, i32
  }
  func.func @transform_1(%arg0: i32) -> (i32, i32) {
    %c0_i32 = arith.constant 0 : i32
    %c0_i32_0 = arith.constant 0 : i32
    %c0_i32_1 = arith.constant 0 : i32
    return %c0_i32, %c0_i32_0 : i32, i32
  }
  func.func @transform_2(%arg0: i32) -> (i32, i32) {
    %c0_i32 = arith.constant 0 : i32
    %c0_i32_0 = arith.constant 0 : i32
    %c0_i32_1 = arith.constant 0 : i32
    return %c0_i32, %c0_i32_0 : i32, i32
  }
  func.func @transform_3(%arg0: i32) -> (i32, i32) {
    %c0_i32 = arith.constant 0 : i32
    %c0_i32_0 = arith.constant 0 : i32
    return %arg0, %c0_i32 : i32, i32
  }
}

</mosaic_0001>

<llo_original>
// kernel: tpu_custom_call.1
$region0: #{tpu_custom_call.1}
  #allocation0 [shape = 'u32[]', space=smem, size = 0x4, offset = 0x4, fixed_abs, tag = 'smem constant byte address 0x4 - core index']
  #allocation1 [shape = 'u32[144,128]{1,0:T(1,128)}', space=vmem, size = 0x12000, scoped, tag = 'internal scratch']
  %s0 = inlined_call_operand.vmem [shape: s32[8,4], index: 0, kind: input, shape index: {}]
  %s1 = inlined_call_operand.vmem [shape: s32[1,256], index: 1, kind: input, shape index: {}]
  %s2 = inlined_call_operand.hbm [shape: f32[256,128], index: 2, kind: input, shape index: {}]
  %s3 = inlined_call_operand.hbm [shape: f32[8,128], index: 3, kind: output, shape index: {}]
  %s4 = sld [smem:[#allocation0]]
  $region26: #{tpu_custom_call.1} parent=0
    _
  %s6 = ssub.s32 1, %s4
  %s7 = scalar_select 0, %s6, %s4
  $region1: #{tpu_custom_call.1} parent=0
    #allocation2 [shape = 'u8[131072]{0}', space=vmem, size = 0x20000, scoped, tag = 'input window, operand 2, single buffered']
    #allocation3 [shape = 's32[1]{0}', space=sflag, size = 0x4, scoped, tag = 'scoped memory for tpu_custom_call.1']
    #allocation4 [shape = 's32[1]{0}', space=sflag, size = 0x4, scoped, tag = 'scoped memory for tpu_custom_call.1']
    #allocation5 [shape = 'u8[4096]{0}', space=vmem, size = 0x1000, scoped, tag = 'output window, operand 0, single buffered']
    %8 = vsyncpa [#allocation3], 0
    %9 = vsyncpa [#allocation4], 0
    // Predicated region
    $region2: #{tpu_custom_call.1} parent=1 // pred_check
      _
    $region3: #{tpu_custom_call.1} parent=1 // pred_check_branch
      %11 = sbr.rel (0) target = $region5
    $region4: #{tpu_custom_call.1} parent=1 // pred_region
      _
    $region5: #{tpu_custom_call.1} parent=1 // pred_fallthru
      _
    // Predicated region
    $region6: #{tpu_custom_call.1} parent=1 // pred_check
      _
    $region7: #{tpu_custom_call.1} parent=1 // pred_check_branch
      %13 = sbr.rel (0) target = $region9
    $region8: #{tpu_custom_call.1} parent=1 // pred_region
      _
    $region9: #{tpu_custom_call.1} parent=1 // pred_fallthru
      _
    // Predicated region
    $region10: #{tpu_custom_call.1} parent=1 // pred_check
      _
    $region11: #{tpu_custom_call.1} parent=1 // pred_check_branch
      %15 = sbr.rel (0) target = $region13
    $region12: #{tpu_custom_call.1} parent=1 // pred_region
      %s17 = ssub.s32 4096, 4096
      %18 = vsyncadd [#allocation3], %s17
      %s19 = sshll.u32 [#allocation2], 4
      %s20 = int_to_ptr.vmem [resolvable:$true] %s19
      %25 = dma.hbm_to_vmem [thread:$0]  %s2, 4096, %s20, [#allocation3], 128, 128, 8
    $region13: #{tpu_custom_call.1} parent=1 // pred_fallthru
      _
    // Predicated region
    $region14: #{tpu_custom_call.1} parent=1 // pred_check
      _
    $region15: #{tpu_custom_call.1} parent=1 // pred_check_branch
      %27 = sbr.rel (0) target = $region17
    $region16: #{tpu_custom_call.1} parent=1 // pred_region
      %28 = dma.done [#allocation3], 4096
    $region17: #{tpu_custom_call.1} parent=1 // pred_fallthru
      _
    %v29 = vld [vmem:[%s0] sm:$0xff]
    %v30 = vld [vmem:[%s1] sm:$0x3]
    %v31 = vlaneseq
    %v32 = vshrl.u32 %v31, 7
    %v33 = vsub.s32 0, %v32
    %v34 = vrot.slane %v30, %v33
    %v35 = vlaneseq
    %v36 = vshrl.u32 %v35, 7
    %v37 = vsub.s32 1, %v36
    %v38 = vrot.slane %v30, %v37
    %39 = vset.pattern.permute.xlu0 0
    %40 = vperm.xlu0 %39, %v29
    %v41 = vpop.permute.xlu0 %40
    %vm42 = vcmp.eq.s32.totalorder %v34, %v41
    %vm43 = vcmp.eq.s32.totalorder %v38, %v41
    %v44 = vadd.s32 %v29, 64
    %45 = vset.pattern.permute.xlu0 1
    %46 = vperm.xlu0 %45, %v44
    %v47 = vpop.permute.xlu0 %46
    %vm48 = vcmp.eq.s32.totalorder %v34, %v47
    %vm49 = vcmp.eq.s32.totalorder %v38, %v47
    %vm50 = vmor %vm42, %vm48
    %vm51 = vmor %vm43, %vm49
    %v52 = vadd.s32 %v29, 128
    %53 = vset.pattern.permute.xlu0 2
    %54 = vperm.xlu0 %53, %v52
    %v55 = vpop.permute.xlu0 %54
    %vm56 = vcmp.eq.s32.totalorder %v34, %v55
    %vm57 = vcmp.eq.s32.totalorder %v38, %v55
    %vm58 = vmor %vm50, %vm56
    %vm59 = vmor %vm51, %vm57
    %v60 = vadd.s32 %v29, 192
    %61 = vset.pattern.permute.xlu0 3
    %62 = vperm.xlu0 %61, %v60
    %v63 = vpop.permute.xlu0 %62
    %vm64 = vcmp.eq.s32.totalorder %v34, %v63
    %vm65 = vcmp.eq.s32.totalorder %v38, %v63
    %vm66 = vmor %vm58, %vm64
    %vm67 = vmor %vm59, %vm65
    %v68 = vsel %vm66, 1, 0
    %v69 = vsel %vm67, 1, 0
    %v70 = vcvt.s32.f32 %v68
    %v71 = vcvt.s32.f32 %v69
    %v72 = vld [vmem:[#allocation2] sm:$0xff]
    %v73 = vld [vmem:[#allocation2 + $0x8] sm:$0xff]
    %v74 = vld [vmem:[#allocation2 + $0x10] sm:$0xff]
    %v75 = vld [vmem:[#allocation2 + $0x18] sm:$0xff]
    %v76 = vld [vmem:[#allocation2 + $0x20] sm:$0xff]
    %v77 = vld [vmem:[#allocation2 + $0x28] sm:$0xff]
    %v78 = vld [vmem:[#allocation2 + $0x30] sm:$0xff]
    %v79 = vld [vmem:[#allocation2 + $0x38] sm:$0xff]
    %v80 = vld [vmem:[#allocation2 + $0x40] sm:$0xff]
    %v81 = vld [vmem:[#allocation2 + $0x48] sm:$0xff]
    %v82 = vld [vmem:[#allocation2 + $0x50] sm:$0xff]
    %v83 = vld [vmem:[#allocation2 + $0x58] sm:$0xff]
    %v84 = vld [vmem:[#allocation2 + $0x60] sm:$0xff]
    %v85 = vld [vmem:[#allocation2 + $0x68] sm:$0xff]
    %v86 = vld [vmem:[#allocation2 + $0x70] sm:$0xff]
    %v87 = vld [vmem:[#allocation2 + $0x78] sm:$0xff]
    %v88 = vld [vmem:[#allocation2 + $0x80] sm:$0xff]
    %v89 = vld [vmem:[#allocation2 + $0x88] sm:$0xff]
    %v90 = vld [vmem:[#allocation2 + $0x90] sm:$0xff]
    %v91 = vld [vmem:[#allocation2 + $0x98] sm:$0xff]
    %v92 = vld [vmem:[#allocation2 + $0xa0] sm:$0xff]
    %v93 = vld [vmem:[#allocation2 + $0xa8] sm:$0xff]
    %v94 = vld [vmem:[#allocation2 + $0xb0] sm:$0xff]
    %v95 = vld [vmem:[#allocation2 + $0xb8] sm:$0xff]
    %v96 = vld [vmem:[#allocation2 + $0xc0] sm:$0xff]
    %v97 = vld [vmem:[#allocation2 + $0xc8] sm:$0xff]
    %v98 = vld [vmem:[#allocation2 + $0xd0] sm:$0xff]
    %v99 = vld [vmem:[#allocation2 + $0xd8] sm:$0xff]
    %v100 = vld [vmem:[#allocation2 + $0xe0] sm:$0xff]
    %v101 = vld [vmem:[#allocation2 + $0xe8] sm:$0xff]
    %v102 = vld [vmem:[#allocation2 + $0xf0] sm:$0xff]
    %v103 = vld [vmem:[#allocation2 + $0xf8] sm:$0xff]
    %104 = vmatprep.subr.mxu0 0.0
    %105 = vmatpush1.msra.mxu0 %v72
    %106 = vmatprep.subr.mxu0 0.0
    %107 = vmatpush1.msra.mxu0 %v73
    %108 = vmatprep.subr.mxu0 0.0
    %109 = vmatpush1.msra.mxu0 %v74
    %110 = vmatprep.subr.mxu0 0.0
    %111 = vmatpush1.msra.mxu0 %v75
    %112 = vmatprep.subr.mxu0 0.0
    %113 = vmatpush1.msra.mxu0 %v76
    %114 = vmatprep.subr.mxu0 0.0
    %115 = vmatpush1.msra.mxu0 %v77
    %116 = vmatprep.subr.mxu0 0.0
    %117 = vmatpush1.msra.mxu0 %v78
    %118 = vmatprep.subr.mxu0 0.0
    %119 = vmatpush1.msra.mxu0 %v79
    %120 = vmatprep.subr.mxu0 0.0
    %121 = vmatpush1.msra.mxu0 %v80
    %122 = vmatprep.subr.mxu0 0.0
    %123 = vmatpush1.msra.mxu0 %v81
    %124 = vmatprep.subr.mxu0 0.0
    %125 = vmatpush1.msra.mxu0 %v82
    %126 = vmatprep.subr.mxu0 0.0
    %127 = vmatpush1.msra.mxu0 %v83
    %128 = vmatprep.subr.mxu0 0.0
    %129 = vmatpush1.msra.mxu0 %v84
    %130 = vmatprep.subr.mxu0 0.0
    %131 = vmatpush1.msra.mxu0 %v85
    %132 = vmatprep.subr.mxu0 0.0
    %133 = vmatpush1.msra.mxu0 %v86
    %134 = vmatprep.subr.mxu0 0.0
    %135 = vmatpush1.msra.mxu0 %v87
    %136 = vmatprep.subr.mxu0 0.0
    %137 = vmatpush1.msra.mxu0 %v88
    %138 = vmatprep.subr.mxu0 0.0
    %139 = vmatpush1.msra.mxu0 %v89
    %140 = vmatprep.subr.mxu0 0.0
    %141 = vmatpush1.msra.mxu0 %v90
    %142 = vmatprep.subr.mxu0 0.0
    %143 = vmatpush1.msra.mxu0 %v91
    %144 = vmatprep.subr.mxu0 0.0
    %145 = vmatpush1.msra.mxu0 %v92
    %146 = vmatprep.subr.mxu0 0.0
    %147 = vmatpush1.msra.mxu0 %v93
    %148 = vmatprep.subr.mxu0 0.0
    %149 = vmatpush1.msra.mxu0 %v94
    %150 = vmatprep.subr.mxu0 0.0
    %151 = vmatpush1.msra.mxu0 %v95
    %152 = vmatprep.subr.mxu0 0.0
    %153 = vmatpush1.msra.mxu0 %v96
    %154 = vmatprep.subr.mxu0 0.0
    %155 = vmatpush1.msra.mxu0 %v97
    %156 = vmatprep.subr.mxu0 0.0
    %157 = vmatpush1.msra.mxu0 %v98
    %158 = vmatprep.subr.mxu0 0.0
    %159 = vmatpush1.msra.mxu0 %v99
    %160 = vmatprep.subr.mxu0 0.0
    %161 = vmatpush1.msra.mxu0 %v100
    %162 = vmatprep.subr.mxu0 0.0
    %163 = vmatpush1.msra.mxu0 %v101
    %164 = vmatprep.subr.mxu0 0.0
    %165 = vmatpush1.msra.mxu0 %v102
    %166 = vmatprep.subr.mxu0 0.0
    %167 = vmatpush1.msra.mxu0 %v103
    %168 = vmatprep.mubr.f32.mxu0 %v71
    %169 = vmatmul.mubr.f32.gmra.mrb[0].mxu0 %v70
    %v170 = vpop.f32.mrb[0].mxu0
    %v171 = vadd.f32 0.0, %v170
    %v172 = vpop.f32.mrb[0].mxu0
    %173 = vdwg.mxu0
    %174 = vst [vmem:[#allocation5] sm:$0xff] %v171
    // Predicated region
    $region18: #{tpu_custom_call.1} parent=1 // pred_check
      _
    $region19: #{tpu_custom_call.1} parent=1 // pred_check_branch
      %176 = sbr.rel (0) target = $region21
    $region20: #{tpu_custom_call.1} parent=1 // pred_region
      %s178 = ssub.s32 128, 128
      %179 = vsyncadd [#allocation4], %s178
      %s181 = sshll.u32 [#allocation5], 4
      %s182 = int_to_ptr.vmem [resolvable:$true] %s181
      %184 = dma.vmem_to_hbm [thread:$0]  %s182, 128, %s3, [#allocation4]
    $region21: #{tpu_custom_call.1} parent=1 // pred_fallthru
      _
    // Predicated region
    $region22: #{tpu_custom_call.1} parent=1 // pred_check
      _
    $region23: #{tpu_custom_call.1} parent=1 // pred_check_branch
      %186 = sbr.rel (0) target = $region25
    $region24: #{tpu_custom_call.1} parent=1 // pred_region
      %187 = dma.done [#allocation4], 128
    $region25: #{tpu_custom_call.1} parent=1 // pred_fallthru
      _
    %188 = vsyncpa [#allocation3], 1
    %189 = vsyncpa [#allocation4], 1

// kernel: tpu_custom_call.1
$region0: #{tpu_custom_call.1}
  #allocation0 [shape = 'u32[]', space=smem, size = 0x4, offset = 0x4, fixed_abs, tag = 'smem constant byte address 0x4 - core index']
  #allocation1 [shape = 'u32[144,128]{1,0:T(1,128)}', space=vmem, size = 0x12000, scoped, tag = 'internal scratch']
  %s0 = inlined_call_operand.vmem [shape: s32[8,4], index: 0, kind: input, shape index: {}]
  %s1 = inlined_call_operand.vmem [shape: s32[1,256], index: 1, kind: input, shape index: {}]
  %s2 = inlined_call_operand.hbm [shape: f32[256,128], index: 2, kind: input, shape index: {}]
  %s3 = inlined_call_operand.hbm [shape: f32[8,128], index: 3, kind: output, shape index: {}]
  %s4 = sld [smem:[#allocation0]]
  $region26: #{tpu_custom_call.1} parent=0
    _
  %s6 = ssub.s32 1, %s4
  %s7 = scalar_select 0, %s6, %s4
  $region1: #{tpu_custom_call.1} parent=0
    #allocation2 [shape = 'u8[131072]{0}', space=vmem, size = 0x20000, scoped, tag = 'input window, operand 2, single buffered']
    #allocation3 [shape = 's32[1]{0}', space=sflag, size = 0x4, scoped, tag = 'scoped memory for tpu_custom_call.1']
    #allocation4 [shape = 's32[1]{0}', space=sflag, size = 0x4, scoped, tag = 'scoped memory for tpu_custom_call.1']
    #allocation5 [shape = 'u8[4096]{0}', space=vmem, size = 0x1000, scoped, tag = 'output window, operand 0, single buffered']
    %8 = vsyncpa [#allocation3], 0
    %9 = vsyncpa [#allocation4], 0
    // Predicated region
    $region2: #{tpu_custom_call.1} parent=1 // pred_check
      _
    $region3: #{tpu_custom_call.1} parent=1 // pred_check_branch
      %11 = sbr.rel (0) target = $region5
    $region4: #{tpu_custom_call.1} parent=1 // pred_region
      _
    $region5: #{tpu_custom_call.1} parent=1 // pred_fallthru
      _
    // Predicated region
    $region6: #{tpu_custom_call.1} parent=1 // pred_check
      _
    $region7: #{tpu_custom_call.1} parent=1 // pred_check_branch
      %13 = sbr.rel (0) target = $region9
    $region8: #{tpu_custom_call.1} parent=1 // pred_region
      _
    $region9: #{tpu_custom_call.1} parent=1 // pred_fallthru
      _
    // Predicated region
    $region10: #{tpu_custom_call.1} parent=1 // pred_check
      _
    $region11: #{tpu_custom_call.1} parent=1 // pred_check_branch
      %15 = sbr.rel (0) target = $region13
    $region12: #{tpu_custom_call.1} parent=1 // pred_region
      %s17 = ssub.s32 4096, 4096
      %18 = vsyncadd [#allocation3], %s17
      %s19 = sshll.u32 [#allocation2], 4
      %s20 = int_to_ptr.vmem [resolvable:$true] %s19
      %25 = dma.hbm_to_vmem [thread:$0]  %s2, 4096, %s20, [#allocation3], 128, 128, 8
    $region13: #{tpu_custom_call.1} parent=1 // pred_fallthru
      _
    // Predicated region
    $region14: #{tpu_custom_call.1} parent=1 // pred_check
      _
    $region15: #{tpu_custom_call.1} parent=1 // pred_check_branch
      %27 = sbr.rel (0) target = $region17
    $region16: #{tpu_custom_call.1} parent=1 // pred_region
      %28 = dma.done [#allocation3], 4096
    $region17: #{tpu_custom_call.1} parent=1 // pred_fallthru
      _
    %v29 = vld [vmem:[%s0] sm:$0xff]
    %v30 = vld [vmem:[%s1] sm:$0x3]
    %v31 = vlaneseq
    %v32 = vshrl.u32 %v31, 7
    %v33 = vsub.s32 0, %v32
    %v34 = vrot.slane %v30, %v33
    %v35 = vlaneseq
    %v36 = vshrl.u32 %v35, 7
    %v37 = vsub.s32 1, %v36
    %v38 = vrot.slane %v30, %v37
    %39 = vset.pattern.permute.xlu0 0
    %40 = vperm.xlu0 %39, %v29
    %v41 = vpop.permute.xlu0 %40
    %vm42 = vcmp.eq.s32.totalorder %v34, %v41
    %vm43 = vcmp.eq.s32.totalorder %v38, %v41
    %v44 = vadd.s32 %v29, 64
    %45 = vset.pattern.permute.xlu0 1
    %46 = vperm.xlu0 %45, %v44
    %v47 = vpop.permute.xlu0 %46
    %vm48 = vcmp.eq.s32.totalorder %v34, %v47
    %vm49 = vcmp.eq.s32.totalorder %v38, %v47
    %vm50 = vmor %vm42, %vm48
    %vm51 = vmor %vm43, %vm49
    %v52 = vadd.s32 %v29, 128
    %53 = vset.pattern.permute.xlu0 2
    %54 = vperm.xlu0 %53, %v52
    %v55 = vpop.permute.xlu0 %54
    %vm56 = vcmp.eq.s32.totalorder %v34, %v55
    %vm57 = vcmp.eq.s32.totalorder %v38, %v55
    %vm58 = vmor %vm50, %vm56
    %vm59 = vmor %vm51, %vm57
    %v60 = vadd.s32 %v29, 192
    %61 = vset.pattern.permute.xlu0 3
    %62 = vperm.xlu0 %61, %v60
    %v63 = vpop.permute.xlu0 %62
    %vm64 = vcmp.eq.s32.totalorder %v34, %v63
    %vm65 = vcmp.eq.s32.totalorder %v38, %v63
    %vm66 = vmor %vm58, %vm64
    %vm67 = vmor %vm59, %vm65
    %v68 = vsel %vm66, 1, 0
    %v69 = vsel %vm67, 1, 0
    %v70 = vcvt.s32.f32 %v68
    %v71 = vcvt.s32.f32 %v69
    %v72 = vld [vmem:[#allocation2] sm:$0xff]
    %v73 = vld [vmem:[#allocation2 + $0x8] sm:$0xff]
    %v74 = vld [vmem:[#allocation2 + $0x10] sm:$0xff]
    %v75 = vld [vmem:[#allocation2 + $0x18] sm:$0xff]
    %v76 = vld [vmem:[#allocation2 + $0x20] sm:$0xff]
    %v77 = vld [vmem:[#allocation2 + $0x28] sm:$0xff]
    %v78 = vld [vmem:[#allocation2 + $0x30] sm:$0xff]
    %v79 = vld [vmem:[#allocation2 + $0x38] sm:$0xff]
    %v80 = vld [vmem:[#allocation2 + $0x40] sm:$0xff]
    %v81 = vld [vmem:[#allocation2 + $0x48] sm:$0xff]
    %v82 = vld [vmem:[#allocation2 + $0x50] sm:$0xff]
    %v83 = vld [vmem:[#allocation2 + $0x58] sm:$0xff]
    %v84 = vld [vmem:[#allocation2 + $0x60] sm:$0xff]
    %v85 = vld [vmem:[#allocation2 + $0x68] sm:$0xff]
    %v86 = vld [vmem:[#allocation2 + $0x70] sm:$0xff]
    %v87 = vld [vmem:[#allocation2 + $0x78] sm:$0xff]
    %v88 = vld [vmem:[#allocation2 + $0x80] sm:$0xff]
    %v89 = vld [vmem:[#allocation2 + $0x88] sm:$0xff]
    %v90 = vld [vmem:[#allocation2 + $0x90] sm:$0xff]
    %v91 = vld [vmem:[#allocation2 + $0x98] sm:$0xff]
    %v92 = vld [vmem:[#allocation2 + $0xa0] sm:$0xff]
    %v93 = vld [vmem:[#allocation2 + $0xa8] sm:$0xff]
    %v94 = vld [vmem:[#allocation2 + $0xb0] sm:$0xff]
    %v95 = vld [vmem:[#allocation2 + $0xb8] sm:$0xff]
    %v96 = vld [vmem:[#allocation2 + $0xc0] sm:$0xff]
    %v97 = vld [vmem:[#allocation2 + $0xc8] sm:$0xff]
    %v98 = vld [vmem:[#allocation2 + $0xd0] sm:$0xff]
    %v99 = vld [vmem:[#allocation2 + $0xd8] sm:$0xff]
    %v100 = vld [vmem:[#allocation2 + $0xe0] sm:$0xff]
    %v101 = vld [vmem:[#allocation2 + $0xe8] sm:$0xff]
    %v102 = vld [vmem:[#allocation2 + $0xf0] sm:$0xff]
    %v103 = vld [vmem:[#allocation2 + $0xf8] sm:$0xff]
    %104 = vmatprep.subr.mxu0 0.0
    %105 = vmatpush1.msra.mxu0 %v72
    %106 = vmatprep.subr.mxu0 0.0
    %107 = vmatpush1.msra.mxu0 %v73
    %108 = vmatprep.subr.mxu0 0.0
    %109 = vmatpush1.msra.mxu0 %v74
    %110 = vmatprep.subr.mxu0 0.0
    %111 = vmatpush1.msra.mxu0 %v75
    %112 = vmatprep.subr.mxu0 0.0
    %113 = vmatpush1.msra.mxu0 %v76
    %114 = vmatprep.subr.mxu0 0.0
    %115 = vmatpush1.msra.mxu0 %v77
    %116 = vmatprep.subr.mxu0 0.0
    %117 = vmatpush1.msra.mxu0 %v78
    %118 = vmatprep.subr.mxu0 0.0
    %119 = vmatpush1.msra.mxu0 %v79
    %120 = vmatprep.subr.mxu0 0.0
    %121 = vmatpush1.msra.mxu0 %v80
    %122 = vmatprep.subr.mxu0 0.0
    %123 = vmatpush1.msra.mxu0 %v81
    %124 = vmatprep.subr.mxu0 0.0
    %125 = vmatpush1.msra.mxu0 %v82
    %126 = vmatprep.subr.mxu0 0.0
    %127 = vmatpush1.msra.mxu0 %v83
    %128 = vmatprep.subr.mxu0 0.0
    %129 = vmatpush1.msra.mxu0 %v84
    %130 = vmatprep.subr.mxu0 0.0
    %131 = vmatpush1.msra.mxu0 %v85
    %132 = vmatprep.subr.mxu0 0.0
    %133 = vmatpush1.msra.mxu0 %v86
    %134 = vmatprep.subr.mxu0 0.0
    %135 = vmatpush1.msra.mxu0 %v87
    %136 = vmatprep.subr.mxu0 0.0
    %137 = vmatpush1.msra.mxu0 %v88
    %138 = vmatprep.subr.mxu0 0.0
    %139 = vmatpush1.msra.mxu0 %v89
    %140 = vmatprep.subr.mxu0 0.0
    %141 = vmatpush1.msra.mxu0 %v90
    %142 = vmatprep.subr.mxu0 0.0
    %143 = vmatpush1.msra.mxu0 %v91
    %144 = vmatprep.subr.mxu0 0.0
    %145 = vmatpush1.msra.mxu0 %v92
    %146 = vmatprep.subr.mxu0 0.0
    %147 = vmatpush1.msra.mxu0 %v93
    %148 = vmatprep.subr.mxu0 0.0
    %149 = vmatpush1.msra.mxu0 %v94
    %150 = vmatprep.subr.mxu0 0.0
    %151 = vmatpush1.msra.mxu0 %v95
    %152 = vmatprep.subr.mxu0 0.0
    %153 = vmatpush1.msra.mxu0 %v96
    %154 = vmatprep.subr.mxu0 0.0
    %155 = vmatpush1.msra.mxu0 %v97
    %156 = vmatprep.subr.mxu0 0.0
    %157 = vmatpush1.msra.mxu0 %v98
    %158 = vmatprep.subr.mxu0 0.0
    %159 = vmatpush1.msra.mxu0 %v99
    %160 = vmatprep.subr.mxu0 0.0
    %161 = vmatpush1.msra.mxu0 %v100
    %162 = vmatprep.subr.mxu0 0.0
    %163 = vmatpush1.msra.mxu0 %v101
    %164 = vmatprep.subr.mxu0 0.0
    %165 = vmatpush1.msra.mxu0 %v102
    %166 = vmatprep.subr.mxu0 0.0
    %167 = vmatpush1.msra.mxu0 %v103
    %168 = vmatprep.mubr.f32.mxu0 %v71
    %169 = vmatmul.mubr.f32.gmra.mrb[0].mxu0 %v70
    %v170 = vpop.f32.mrb[0].mxu0
    %v171 = vadd.f32 0.0, %v170
    %v172 = vpop.f32.mrb[0].mxu0
    %173 = vdwg.mxu0
    %174 = vst [vmem:[#allocation5] sm:$0xff] %v171
    // Predicated region
    $region18: #{tpu_custom_call.1} parent=1 // pred_check
      _
    $region19: #{tpu_custom_call.1} parent=1 // pred_check_branch
      %176 = sbr.rel (0) target = $region21
    $region20: #{tpu_custom_call.1} parent=1 // pred_region
      %s178 = ssub.s32 128, 128
      %179 = vsyncadd [#allocation4], %s178
      %s181 = sshll.u32 [#allocation5], 4
      %s182 = int_to_ptr.vmem [resolvable:$true] %s181
      %184 = dma.vmem_to_hbm [thread:$0]  %s182, 128, %s3, [#allocation4]
    $region21: #{tpu_custom_call.1} parent=1 // pred_fallthru
      _
    // Predicated region
    $region22: #{tpu_custom_call.1} parent=1 // pred_check
      _
    $region23: #{tpu_custom_call.1} parent=1 // pred_check_branch
      %186 = sbr.rel (0) target = $region25
    $region24: #{tpu_custom_call.1} parent=1 // pred_region
      %187 = dma.done [#allocation4], 128
    $region25: #{tpu_custom_call.1} parent=1 // pred_fallthru
      _
    %188 = vsyncpa [#allocation3], 1
    %189 = vsyncpa [#allocation4], 1

</llo_original>
